<compile_context>
chip_gen: v6e
topology: v6e:2x2x1
jax: 0.10.0
libtpu: 0.0.40
codegen_flags: <defaults>
</compile_context>

<pallas_src>
import functools
import math

import jax
import jax.numpy as jnp
from jax.experimental import pallas as pl
from jax.experimental.pallas import tpu as pltpu


# ----------------------------------------------------------------------------
# Pallas kernel
# ----------------------------------------------------------------------------
def _cc_kernel(fs_ref, ft_ref, out_ref, acc_ref, *, denom):
    j = pl.program_id(0)

    @pl.when(j == 0)
    def _():
        acc_ref[...] = jnp.zeros_like(acc_ref)

    fs = fs_ref[...].astype(jnp.float32)             # (N, TD)
    ft = ft_ref[...].astype(jnp.float32)             # (N, TD)
    delta = jnp.abs(fs - ft)                         # (N, TD)
    # consecutive-sample products; vector accumulate only (no per-step reduce)
    acc_ref[...] += delta[:-1, :] * delta[1:, :]     # (N-1, TD)

    @pl.when(j == pl.num_programs(0) - 1)
    def _():
        out_ref[...] = (jnp.sum(acc_ref[...]) / denom).reshape(1, 1)


# ----------------------------------------------------------------------------
# Tile selection: lane-aligned, exact divisor of D (no partial blocks)
# ----------------------------------------------------------------------------
def _pick_feature_tile(n, d, itemsize):
    # Whole feature axis if it is small (2 inputs x 2 pipeline buffers well
    # under VMEM limits on all generations) or not lane-aligned (full-extent
    # blocks are always legal regardless of the (8,128) rule).
    if (4 * n * d * itemsize) <= (8 << 20) or d % 128 != 0:
        return d
    target = 2 << 20                                 # ~2 MiB per input tile
    td = (target // (n * itemsize)) // 128 * 128
    td = max(128, min(td, d))
    while d % td != 0:                               # exact divisor of D
        td -= 128
    return td


# ----------------------------------------------------------------------------
# Wrapper
# ----------------------------------------------------------------------------
def correlation_congruence_loss(f_s, f_t):
    assert f_s.shape == f_t.shape, "student/teacher features must match"
    n = f_s.shape[0]
    assert n >= 2, "need at least two samples for consecutive-pair products"
    d = int(math.prod(f_s.shape[1:]))
    # mean over (N-1, shape[2:]) elements of the dim-1 sums
    denom = float((n - 1) * int(math.prod(f_s.shape[2:])))

    # Keep the native dtype; only reshape (no upcast) before the kernel.
    fs = f_s.reshape(n, d)
    ft = f_t.reshape(n, d)

    td = _pick_feature_tile(n, d, fs.dtype.itemsize)
    grid = (d // td,)

    out = pl.pallas_call(
        functools.partial(_cc_kernel, denom=denom),
        out_shape=jax.ShapeDtypeStruct((1, 1), jnp.float32),
        grid_spec=pltpu.PrefetchScalarGridSpec(
            num_scalar_prefetch=0,
            grid=grid,
            in_specs=[
                pl.BlockSpec((n, td), lambda j: (0, j)),
                pl.BlockSpec((n, td), lambda j: (0, j)),
            ],
            out_specs=pl.BlockSpec((1, 1), lambda j: (0, 0)),
            scratch_shapes=[pltpu.VMEM((n - 1, td), jnp.float32)],
        ),
        compiler_params=pltpu.CompilerParams(
            dimension_semantics=("arbitrary",)),     # feature axis = reduction
    )(fs, ft)
    return out[0, 0]


# ----------------------------------------------------------------------------
# Pure JAX reference (mirrors the PyTorch forward)
# ----------------------------------------------------------------------------
def _cc_ref(f_s, f_t):
    delta = jnp.abs(f_s.astype(jnp.float32) - f_t.astype(jnp.float32))
    return jnp.mean(jnp.sum(delta[:-1] * delta[1:], axis=1))


if __name__ == "__main__":
    key = jax.random.PRNGKey(0)
    k1, k2, k3, k4 = jax.random.split(key, 4)

    # (N, D) embeddings, as the CC-loss forward implies.
    fs32 = jax.random.normal(k1, (8, 160), dtype=jnp.float32)   # non-128 D path
    ft32 = jax.random.normal(k2, (8, 160), dtype=jnp.float32)

    fs16 = jax.random.normal(k3, (4, 256), dtype=jnp.float32).astype(jnp.bfloat16)
    ft16 = jax.random.normal(k4, (4, 256), dtype=jnp.float32).astype(jnp.bfloat16)

    got32 = jax.block_until_ready(correlation_congruence_loss(fs32, ft32))
    got16 = jax.block_until_ready(correlation_congruence_loss(fs16, ft16))

    want32 = _cc_ref(fs32, ft32)
    want16 = _cc_ref(fs16, ft16)

    assert jnp.allclose(got32, want32, rtol=1e-5, atol=1e-6), (got32, want32)
    assert jnp.allclose(got16, want16, rtol=1e-5, atol=1e-6), (got16, want16)

    print("KERNEL_OK")
</pallas_src>

<mosaic_0001>
module attributes {stable_mosaic.version = 11 : i64} {
  func.func @_cc_kernel(%arg0: i32, %arg1: memref<8x160xf32, #tpu.memory_space<vmem>>, %arg2: memref<8x160xf32, #tpu.memory_space<vmem>>, %arg3: memref<1x1xf32, #tpu.memory_space<vmem>>, %arg4: memref<7x160xf32, #tpu.memory_space<vmem>>) attributes {dimension_semantics = [#tpu.dimension_semantics<arbitrary>], iteration_bounds = array<i64: 1>, scalar_prefetch = 0 : i64, scratch_operands = 1 : i64, tpu.core_type = #tpu.core_type<tc>, window_params = [{transform_indices = @transform_0, window_bounds = array<i64: 8, 160>}, {transform_indices = @transform_1, window_bounds = array<i64: 8, 160>}, {pipeline_mode = #tpu.pipeline_mode<synchronous>, transform_indices = @transform_2, window_bounds = array<i64: 1, 1>}]} {
    %c0_i32 = arith.constant 0 : i32
    %0 = arith.cmpi eq, %arg0, %c0_i32 : i32
    %1 = arith.extui %0 : i1 to i32
    %c0_i32_0 = arith.constant 0 : i32
    %2 = arith.cmpi ne, %1, %c0_i32_0 : i32
    scf.if %2 {
      %cst = arith.constant 0.000000e+00 : f32
      %16 = vector.broadcast %cst : f32 to vector<7x160xf32>
      %c0_10 = arith.constant 0 : index
      %c0_11 = arith.constant 0 : index
      %17 = vector.load %arg4[%c0_10, %c0_11] : memref<7x160xf32, #tpu.memory_space<vmem>>, vector<7x160xf32>
      tpu.vector_store %arg4[%c0_10, %c0_11], %16 {strides = array<i32>} : memref<7x160xf32, #tpu.memory_space<vmem>>, vector<7x160xf32>,
    } else {
    }
    %c0 = arith.constant 0 : index
    %c0_1 = arith.constant 0 : index
    %3 = vector.load %arg1[%c0, %c0_1] : memref<8x160xf32, #tpu.memory_space<vmem>>, vector<8x160xf32>
    %c0_2 = arith.constant 0 : index
    %c0_3 = arith.constant 0 : index
    %4 = vector.load %arg2[%c0_2, %c0_3] : memref<8x160xf32, #tpu.memory_space<vmem>>, vector<8x160xf32>
    %5 = arith.subf %3, %4 : vector<8x160xf32>
    %6 = math.absf %5 : vector<8x160xf32>
    %c0_4 = arith.constant 0 : index
    %c0_5 = arith.constant 0 : index
    %7 = vector.load %arg4[%c0_4, %c0_5] : memref<7x160xf32, #tpu.memory_space<vmem>>, vector<7x160xf32>
    %8 = vector.extract_strided_slice %6 {offsets = [0, 0], sizes = [7, 160], strides = [1, 1]} : vector<8x160xf32> to vector<7x160xf32>
    %9 = vector.extract_strided_slice %6 {offsets = [1, 0], sizes = [7, 160], strides = [1, 1]} : vector<8x160xf32> to vector<7x160xf32>
    %10 = arith.mulf %8, %9 : vector<7x160xf32>
    %11 = arith.addf %7, %10 : vector<7x160xf32>
    %c0_6 = arith.constant 0 : index
    %c0_7 = arith.constant 0 : index
    %12 = vector.load %arg4[%c0_6, %c0_7] : memref<7x160xf32, #tpu.memory_space<vmem>>, vector<7x160xf32>
    tpu.vector_store %arg4[%c0_6, %c0_7], %11 {strides = array<i32>} : memref<7x160xf32, #tpu.memory_space<vmem>>, vector<7x160xf32>,
    %c0_i32_8 = arith.constant 0 : i32
    %13 = arith.cmpi eq, %arg0, %c0_i32_8 : i32
    %14 = arith.extui %13 : i1 to i32
    %c0_i32_9 = arith.constant 0 : i32
    %15 = arith.cmpi ne, %14, %c0_i32_9 : i32
    scf.if %15 {
      %c0_10 = arith.constant 0 : index
      %c0_11 = arith.constant 0 : index
      %16 = vector.load %arg4[%c0_10, %c0_11] : memref<7x160xf32, #tpu.memory_space<vmem>>, vector<7x160xf32>
      %17 = vector.shape_cast %16 : vector<7x160xf32> to vector<1x7x160xf32>
      %cst = arith.constant dense<0.000000e+00> : vector<1xf32>
      %18 = vector.multi_reduction <add>, %17, %cst [1, 2] : vector<1x7x160xf32> to vector<1xf32>
      %19 = vector.shape_cast %18 : vector<1xf32> to vector<1x1x1xf32>
      %20 = vector.extract %19[0, 0, 0] : f32 from vector<1x1x1xf32>
      %cst_12 = arith.constant 7.000000e+00 : f32
      %21 = arith.divf %20, %cst_12 : f32
      %22 = vector.broadcast %21 : f32 to vector<1x1xf32>
      %c0_13 = arith.constant 0 : index
      %c0_14 = arith.constant 0 : index
      %23 = vector.load %arg3[%c0_13, %c0_14] : memref<1x1xf32, #tpu.memory_space<vmem>>, vector<1x1xf32>
      tpu.vector_store %arg3[%c0_13, %c0_14], %22 {strides = array<i32>} : memref<1x1xf32, #tpu.memory_space<vmem>>, vector<1x1xf32>,
    } else {
    }
    return
  }
  func.func @transform_0(%arg0: i32) -> (i32, i32) {
    %c0_i32 = arith.constant 0 : i32
    %c0_i32_0 = arith.constant 0 : i32
    return %c0_i32, %arg0 : i32, i32
  }
  func.func @transform_1(%arg0: i32) -> (i32, i32) {
    %c0_i32 = arith.constant 0 : i32
    %c0_i32_0 = arith.constant 0 : i32
    return %c0_i32, %arg0 : i32, i32
  }
  func.func @transform_2(%arg0: i32) -> (i32, i32) {
    %c0_i32 = arith.constant 0 : i32
    %c0_i32_0 = arith.constant 0 : i32
    %c0_i32_1 = arith.constant 0 : i32
    return %c0_i32, %c0_i32_0 : i32, i32
  }
}

</mosaic_0001>

<llo_original>
// kernel: tpu_custom_call.1
$region0: #{tpu_custom_call.1}
  #allocation0 [shape = 'u32[]', space=smem, size = 0x4, offset = 0x4, fixed_abs, tag = 'smem constant byte address 0x4 - core index']
  #allocation1 [shape = 'u32[144,128]{1,0:T(1,128)}', space=vmem, size = 0x12000, scoped, tag = 'internal scratch']
  #allocation2 [shape = 'f32[7,160]{1,0:T(8,128)}', space=vmem, size = 0x2000, scoped, tag = 'scratch operand']
  %s0 = inlined_call_operand.hbm [shape: f32[8,160], index: 0, kind: input, shape index: {}]
  %s1 = inlined_call_operand.hbm [shape: f32[8,160], index: 1, kind: input, shape index: {}]
  %s2 = inlined_call_operand.hbm [shape: f32[1,1], index: 2, kind: output, shape index: {}]
  %s3 = sld [smem:[#allocation0]]
  $region34: #{tpu_custom_call.1} parent=0
    _
  %s5 = ssub.s32 1, %s3
  %s6 = scalar_select 0, %s5, %s3
  $region1: #{tpu_custom_call.1} parent=0
    #allocation3 [shape = 'u8[8192]{0}', space=vmem, size = 0x2000, scoped, tag = 'input window, operand 0, single buffered']
    #allocation4 [shape = 's32[1]{0}', space=sflag, size = 0x4, scoped, tag = 'scoped memory for tpu_custom_call.1']
    #allocation5 [shape = 's32[1]{0}', space=sflag, size = 0x4, scoped, tag = 'scoped memory for tpu_custom_call.1']
    #allocation6 [shape = 'u8[8192]{0}', space=vmem, size = 0x2000, scoped, tag = 'input window, operand 1, single buffered']
    #allocation7 [shape = 's32[1]{0}', space=sflag, size = 0x4, scoped, tag = 'scoped memory for tpu_custom_call.1']
    #allocation8 [shape = 'u8[512]{0}', space=vmem, size = 0x400, scoped, tag = 'output window, operand 0, single buffered']
    %7 = vsyncpa [#allocation4], 0
    %8 = vsyncpa [#allocation7], 0
    %9 = vsyncpa [#allocation5], 0
    // Predicated region
    $region2: #{tpu_custom_call.1} parent=1 // pred_check
      _
    $region3: #{tpu_custom_call.1} parent=1 // pred_check_branch
      %11 = sbr.rel (0) target = $region5
    $region4: #{tpu_custom_call.1} parent=1 // pred_region
      %s13 = ssub.s32 256, 256
      %14 = vsyncadd [#allocation4], %s13
      %s16 = sshll.u32 [#allocation3], 4
      %s17 = int_to_ptr.vmem [resolvable:$true] %s16
      %19 = dma.hbm_to_vmem [thread:$0]  %s0, 256, %s17, [#allocation4]
    $region5: #{tpu_custom_call.1} parent=1 // pred_fallthru
      _
    // Predicated region
    $region6: #{tpu_custom_call.1} parent=1 // pred_check
      _
    $region7: #{tpu_custom_call.1} parent=1 // pred_check_branch
      %21 = sbr.rel (0) target = $region9
    $region8: #{tpu_custom_call.1} parent=1 // pred_region
      %s23 = ssub.s32 256, 256
      %24 = vsyncadd [#allocation7], %s23
      %s26 = sshll.u32 [#allocation6], 4
      %s27 = int_to_ptr.vmem [resolvable:$true] %s26
      %29 = dma.hbm_to_vmem [thread:$0]  %s1, 256, %s27, [#allocation7]
    $region9: #{tpu_custom_call.1} parent=1 // pred_fallthru
      _
    // Predicated region
    $region10: #{tpu_custom_call.1} parent=1 // pred_check
      _
    $region11: #{tpu_custom_call.1} parent=1 // pred_check_branch
      %31 = sbr.rel (0) target = $region13
    $region12: #{tpu_custom_call.1} parent=1 // pred_region
      %32 = dma.done [#allocation4], 256
    $region13: #{tpu_custom_call.1} parent=1 // pred_fallthru
      _
    // Predicated region
    $region14: #{tpu_custom_call.1} parent=1 // pred_check
      _
    $region15: #{tpu_custom_call.1} parent=1 // pred_check_branch
      %34 = sbr.rel (0) target = $region17
    $region16: #{tpu_custom_call.1} parent=1 // pred_region
      %35 = dma.done [#allocation7], 256
    $region17: #{tpu_custom_call.1} parent=1 // pred_fallthru
      _
    %p36 = scmp.eq.s32.totalorder 0, 0
    // Predicated region
    $region18: #{tpu_custom_call.1} parent=1 // pred_check
      %p37 = pneg %p36
    $region19: #{tpu_custom_call.1} parent=1 // pred_check_branch
      %39 = sbr.rel (%p37) target = $region21
    $region20: #{tpu_custom_call.1} parent=1 // pred_region
      %40 = vst [vmem:[#allocation2] sm:$0x7f] 0.0
      %vm41 = vcmask 260096
      %42 = vst.msk [vmem:[#allocation2 + $0x8] sm:$0x7f] %vm41, 0.0
    $region21: #{tpu_custom_call.1} parent=1 // pred_fallthru
      _
    %v43 = vld [vmem:[#allocation3] sm:$0xff]
    %v44 = vld [vmem:[#allocation3 + $0x8] sm:$0xff]
    %v45 = vld [vmem:[#allocation6] sm:$0xff]
    %v46 = vld [vmem:[#allocation6 + $0x8] sm:$0xff]
    %v47 = vsub.f32 %v43, %v45
    %v48 = vsub.f32 %v44, %v46
    %v49 = vand.u32 2147483647, %v47
    %v50 = vand.u32 2147483647, %v48
    %v51 = vld [vmem:[#allocation2] sm:$0x7f]
    %v52 = vld [vmem:[#allocation2 + $0x8] sm:$0x7f]
    %v55 = vrot.slane %v49, 1
    %v56 = vrot.slane %v50, 1
    %v59 = vmul.f32 %v49, %v55
    %v60 = vmul.f32 %v50, %v56
    %v61 = vadd.f32 %v51, %v59
    %v62 = vadd.f32 %v52, %v60
    %63 = vst [vmem:[#allocation2] sm:$0x7f] %v61
    %vm64 = vcmask 260096
    %65 = vst.msk [vmem:[#allocation2 + $0x8] sm:$0x7f] %vm64, %v62
    // Predicated region
    $region22: #{tpu_custom_call.1} parent=1 // pred_check
      %p66 = pneg %p36
    $region23: #{tpu_custom_call.1} parent=1 // pred_check_branch
      %68 = sbr.rel (%p66) target = $region25
    $region24: #{tpu_custom_call.1} parent=1 // pred_region
      %v69 = vld [vmem:[#allocation2] sm:$0x7f]
      %v70 = vld [vmem:[#allocation2 + $0x8] sm:$0x7f]
      %vm71 = vcmask 1046528
      %v72 = vsel %vm71, %v69, 0.0
      %v73 = vsel %vm64, %v70, 0.0
      %v74 = vadd.f32 %v72, %v73
      %75 = vadd.xlane.f32.xlu0 %v74
      %v76 = vpop.xlane.xlu0 %75
      %v77 = vrot.slane %v76, 4
      %v78 = vadd.f32 %v76, %v77
      %v79 = vrot.slane %v78, 2
      %v80 = vadd.f32 %v78, %v79
      %v81 = vrot.slane %v80, 1
      %v82 = vadd.f32 %v80, %v81
      %s83 = vtos %v82
      %v84 = vrcp.pop 7.0
      %s85 = vtos %v84
      %s86 = smul.f32 %s83, %s85
      %v87 = vstv %s86
      %vm88 = vcmask 0
      %89 = vst.msk [vmem:[#allocation8] sm:$0x1] %vm88, %v87
    $region25: #{tpu_custom_call.1} parent=1 // pred_fallthru
      _
    // Predicated region
    $region26: #{tpu_custom_call.1} parent=1 // pred_check
      _
    $region27: #{tpu_custom_call.1} parent=1 // pred_check_branch
      %91 = sbr.rel (0) target = $region29
    $region28: #{tpu_custom_call.1} parent=1 // pred_region
      %s93 = ssub.s32 16, 16
      %94 = vsyncadd [#allocation5], %s93
      %s96 = sshll.u32 [#allocation8], 4
      %s97 = int_to_ptr.vmem [resolvable:$true] %s96
      %99 = dma.vmem_to_hbm [thread:$0]  %s97, 16, %s2, [#allocation5]
    $region29: #{tpu_custom_call.1} parent=1 // pred_fallthru
      _
    // Predicated region
    $region30: #{tpu_custom_call.1} parent=1 // pred_check
      _
    $region31: #{tpu_custom_call.1} parent=1 // pred_check_branch
      %101 = sbr.rel (0) target = $region33
    $region32: #{tpu_custom_call.1} parent=1 // pred_region
      %102 = dma.done [#allocation5], 16
    $region33: #{tpu_custom_call.1} parent=1 // pred_fallthru
      _
    %103 = vsyncpa [#allocation4], 1
    %104 = vsyncpa [#allocation7], 1
    %105 = vsyncpa [#allocation5], 1

</llo_original>
